<compile_context>
chip_gen: v7x
topology: tpu7x:2x2x1
jax: 0.10.0
libtpu: 0.0.40
codegen_flags: <defaults>
</compile_context>

<pallas_src>
import functools

import jax
import jax.numpy as jnp
from jax.experimental import pallas as pl
from jax.experimental.pallas import tpu as pltpu

IN_FEATURES = 512
OUT_FEATURES = 15
N_PAD = 128          # lane-dense padded weight width inside the kernel (MXU lanes)
TB_MAX = 4096        # max batch tile (f32 x: 8 MiB/tile, double-buffered 16 MiB)
SPLIT_THRESHOLD = 256  # above this batch size, force >= 2 grid steps (v7x 2 TCs)


def _round_up(x, m):
    return ((x + m - 1) // m) * m


def _choose_tb(batch, row_mult):
    """Pick the batch tile.

    Small batches: one block equal to the full batch dim (legal regardless of
    divisibility).  Larger batches: at least two grid steps so v7x's two
    TensorCores both get work, capped at TB_MAX, rows rounded to the sublane
    tile of the input dtype (8 for f32, 16 for bf16).
    """
    if batch <= SPLIT_THRESHOLD:
        return batch
    half = _round_up(-(-batch // 2), row_mult)   # ceil(batch/2), rounded up
    return min(TB_MAX, half)


def linear_relu_kernel(x_ref, w_ref, b_ref, o_ref):
    # x_ref: (tb, 512) input dtype; w_ref: (512, 128) bf16 (N zero-padded);
    # b_ref: (1, 15) f32; o_ref: (tb, 15) f32.
    x = x_ref[...].astype(w_ref.dtype)           # in-kernel cast -> fused, no extra HBM pass
    y = jnp.dot(x, w_ref[...], preferred_element_type=jnp.float32)   # (tb, 128) f32 on MXU
    y = y[:, :OUT_FEATURES] + b_ref[...]         # drop zero-padded lanes, add bias
    o_ref[...] = jnp.maximum(y, 0.0).astype(o_ref.dtype)


def prepare_res_fc_params(weight, bias, *, use_bf16=True):
    """One-time (model-init) param prep: transpose, zero-pad N to 128, cast.

    Args:
      weight: (15, 512) float32 — PyTorch nn.Linear layout (out, in).
      bias:   (15,) float32.
    Returns:
      w_p: (512, 128) bf16 (or f32 if use_bf16=False), columns 15..127 are zero.
      b_p: (1, 15) float32.
    """
    wt = jnp.asarray(weight, jnp.float32).T                       # (512, 15)
    w_p = jnp.zeros((IN_FEATURES, N_PAD), jnp.float32).at[:, :OUT_FEATURES].set(wt)
    if use_bf16:
        w_p = w_p.astype(jnp.bfloat16)
    b_p = jnp.asarray(bias, jnp.float32).reshape(1, OUT_FEATURES)
    return w_p, b_p


@jax.jit
def res_fc_forward(x, w_p, b_p):
    """relu(x @ W^T + b) with prepared params from prepare_res_fc_params.

    Args:
      x:   (B, 512) float32 (or bfloat16 — used as-is, halves HBM reads).
      w_p: (512, 128) prepared weight (zero-padded, bf16 or f32).
      b_p: (1, 15) float32 bias.
    Returns:
      (B, 15) float32.
    """
    B = x.shape[0]
    row_mult = 16 if x.dtype == jnp.bfloat16 else 8
    tb = _choose_tb(B, row_mult)
    grid = (pl.cdiv(B, tb),)

    return pl.pallas_call(
        linear_relu_kernel,
        out_shape=jax.ShapeDtypeStruct((B, OUT_FEATURES), jnp.float32),
        grid_spec=pl.GridSpec(
            grid=grid,
            in_specs=[
                # x: streamed per batch tile (auto double-buffered).
                pl.BlockSpec((tb, IN_FEATURES), lambda i: (i, 0)),
                # W: constant block index -> resident in VMEM, DMA'd once.
                pl.BlockSpec((IN_FEATURES, N_PAD), lambda i: (0, 0)),
                # bias: (1, 15) == full array dims -> legal, resident.
                pl.BlockSpec((1, OUT_FEATURES), lambda i: (0, 0)),
            ],
            # Direct (tb, 15) output block: last dim equals full array dim.
            out_specs=pl.BlockSpec((tb, OUT_FEATURES), lambda i: (i, 0)),
        ),
        compiler_params=pltpu.CompilerParams(
            # Row tiles are independent -> shard across TensorCores (v7x).
            dimension_semantics=("parallel",),
            # Explicit scoped-VMEM budget so tb=4096 f32 tiles (16 MiB
            # double-buffered) work on v5e (16 MiB default) as well as v6e/v7x.
            vmem_limit_bytes=32 * 1024 * 1024,
        ),
    )(x, w_p, b_p)


if __name__ == "__main__":
    key = jax.random.PRNGKey(0)
    k_x, k_w, k_b = jax.random.split(key, 3)

    # PyTorch nn.Linear(512, 15) stores weight as (out_features, in_features).
    w = jax.random.normal(k_w, (OUT_FEATURES, IN_FEATURES), dtype=jnp.float32) * 0.02
    b = jax.random.normal(k_b, (OUT_FEATURES,), dtype=jnp.float32) * 0.02

    # One-time param prep (hoisted out of the per-call path).
    w_p, b_p = prepare_res_fc_params(w, b, use_bf16=True)

    # Small batch + a non-divisible multi-block batch (exercises partial-tile masking).
    for B in (8, 300):
        x = jax.random.normal(jax.random.fold_in(k_x, B), (B, IN_FEATURES),
                              dtype=jnp.float32)
        out = jax.block_until_ready(res_fc_forward(x, w_p, b_p))

        ref_f32 = jnp.maximum(x @ w.T + b, 0.0)
        ref_bf16 = jnp.maximum(
            jnp.dot(x.astype(jnp.bfloat16), w.T.astype(jnp.bfloat16),
                    preferred_element_type=jnp.float32) + b, 0.0)

        assert out.shape == (B, OUT_FEATURES)
        # Tight vs bf16-input reference (same precision path as the kernel).
        assert jnp.allclose(out, ref_bf16, atol=1e-3, rtol=1e-3)
        # Loose vs full-f32 reference (bf16 rounding of x and W only).
        assert jnp.allclose(out, ref_f32, atol=2.5e-2, rtol=2.5e-2)

    print("KERNEL_OK")
</pallas_src>

<mosaic_0001>
module attributes {stable_mosaic.version = 11 : i64} {
  func.func @linear_relu_kernel(%arg0: i32, %arg1: memref<8x512xf32, #tpu.memory_space<vmem>>, %arg2: memref<512x128xbf16, #tpu.memory_space<vmem>>, %arg3: memref<1x15xf32, #tpu.memory_space<vmem>>, %arg4: memref<8x15xf32, #tpu.memory_space<vmem>>) attributes {dimension_semantics = [#tpu.dimension_semantics<parallel>], iteration_bounds = array<i64: 1>, scalar_prefetch = 0 : i64, scratch_operands = 0 : i64, tpu.core_type = #tpu.core_type<tc>, window_params = [{transform_indices = @transform_0, window_bounds = array<i64: 8, 512>}, {pipeline_mode = #tpu.pipeline_mode<synchronous>, transform_indices = @transform_1, window_bounds = array<i64: 512, 128>}, {pipeline_mode = #tpu.pipeline_mode<synchronous>, transform_indices = @transform_2, window_bounds = array<i64: 1, 15>}, {transform_indices = @transform_3, window_bounds = array<i64: 8, 15>}]} {
    %c0 = arith.constant 0 : index
    %c0_0 = arith.constant 0 : index
    %0 = vector.load %arg1[%c0, %c0_0] : memref<8x512xf32, #tpu.memory_space<vmem>>, vector<8x512xf32>
    %1 = arith.truncf %0 : vector<8x512xf32> to vector<8x512xbf16>
    %c0_1 = arith.constant 0 : index
    %c0_2 = arith.constant 0 : index
    %2 = vector.load %arg2[%c0_1, %c0_2] : memref<512x128xbf16, #tpu.memory_space<vmem>>, vector<512x128xbf16>
    %cst = arith.constant dense<0.000000e+00> : vector<8x128xf32>
    %3 = tpu.matmul %1, %2, %cst {dimension_numbers = #tpu.dot_dimension_numbers<[1], [0], [0], [1], [0, 0, 1, 1], [], []>} : vector<8x512xbf16>, vector<512x128xbf16>, vector<8x128xf32> -> vector<8x128xf32>
    %4 = vector.extract_strided_slice %3 {offsets = [0, 0], sizes = [8, 15], strides = [1, 1]} : vector<8x128xf32> to vector<8x15xf32>
    %c0_3 = arith.constant 0 : index
    %c0_4 = arith.constant 0 : index
    %5 = vector.load %arg3[%c0_3, %c0_4] : memref<1x15xf32, #tpu.memory_space<vmem>>, vector<1x15xf32>
    %6 = vector.broadcast %5 : vector<1x15xf32> to vector<8x15xf32>
    %7 = arith.addf %4, %6 : vector<8x15xf32>
    %cst_5 = arith.constant 0.000000e+00 : f32
    %8 = vector.broadcast %cst_5 : f32 to vector<8x15xf32>
    %9 = arith.maximumf %7, %8 : vector<8x15xf32>
    %c0_6 = arith.constant 0 : index
    %c0_7 = arith.constant 0 : index
    %10 = vector.load %arg4[%c0_6, %c0_7] : memref<8x15xf32, #tpu.memory_space<vmem>>, vector<8x15xf32>
    tpu.vector_store %arg4[%c0_6, %c0_7], %9 {strides = array<i32>} : memref<8x15xf32, #tpu.memory_space<vmem>>, vector<8x15xf32>,
    return
  }
  func.func @transform_0(%arg0: i32) -> (i32, i32) {
    %c0_i32 = arith.constant 0 : i32
    %c0_i32_0 = arith.constant 0 : i32
    return %arg0, %c0_i32 : i32, i32
  }
  func.func @transform_1(%arg0: i32) -> (i32, i32) {
    %c0_i32 = arith.constant 0 : i32
    %c0_i32_0 = arith.constant 0 : i32
    %c0_i32_1 = arith.constant 0 : i32
    return %c0_i32, %c0_i32_0 : i32, i32
  }
  func.func @transform_2(%arg0: i32) -> (i32, i32) {
    %c0_i32 = arith.constant 0 : i32
    %c0_i32_0 = arith.constant 0 : i32
    %c0_i32_1 = arith.constant 0 : i32
    return %c0_i32, %c0_i32_0 : i32, i32
  }
  func.func @transform_3(%arg0: i32) -> (i32, i32) {
    %c0_i32 = arith.constant 0 : i32
    %c0_i32_0 = arith.constant 0 : i32
    return %arg0, %c0_i32 : i32, i32
  }
}

</mosaic_0001>

<llo_original>
// kernel: res_fc_forward.1
$region0: #{res_fc_forward.1}
  #allocation0 [shape = 'u32[]', space=smem, size = 0x4, offset = 0x4, fixed_abs, tag = 'smem constant byte address 0x4 - core index']
  #allocation1 [shape = 'u32[144,128]{1,0:T(1,128)}', space=vmem, size = 0x12000, scoped, tag = 'internal scratch']
  %s0 = inlined_call_operand.hbm [shape: f32[8,512], index: 0, kind: input, shape index: {}]
  %s1 = inlined_call_operand.hbm [shape: bf16[512,128], index: 1, kind: input, shape index: {}]
  %s2 = inlined_call_operand.vmem [shape: f32[1,15], index: 2, kind: input, shape index: {}]
  %s3 = inlined_call_operand.hbm [shape: f32[8,15], index: 3, kind: output, shape index: {}]
  %s4 = sld [smem:[#allocation0]]
  $region30: #{res_fc_forward.1} parent=0
    _
  %s6 = ssub.s32 1, %s4
  %s7 = scalar_select 0, %s6, %s4
  $region1: #{res_fc_forward.1} parent=0
    #allocation2 [shape = 'u8[16384]{0}', space=vmem, size = 0x4000, scoped, tag = 'input window, operand 0, single buffered']
    #allocation3 [shape = 's32[1]{0}', space=sflag, size = 0x4, scoped, tag = 'scoped memory for res_fc_forward.1']
    #allocation4 [shape = 's32[1]{0}', space=sflag, size = 0x4, scoped, tag = 'scoped memory for res_fc_forward.1']
    #allocation5 [shape = 'u8[131072]{0}', space=vmem, size = 0x20000, scoped, tag = 'input window, operand 1, single buffered']
    #allocation6 [shape = 's32[1]{0}', space=sflag, size = 0x4, scoped, tag = 'scoped memory for res_fc_forward.1']
    #allocation7 [shape = 'u8[4096]{0}', space=vmem, size = 0x1000, scoped, tag = 'output window, operand 0, single buffered']
    %8 = vsyncpa [#allocation3], 0
    %9 = vsyncpa [#allocation6], 0
    %10 = vsyncpa [#allocation4], 0
    // Predicated region
    $region2: #{res_fc_forward.1} parent=1 // pred_check
      _
    $region3: #{res_fc_forward.1} parent=1 // pred_check_branch
      %12 = sbr.rel (0) target = $region5
    $region4: #{res_fc_forward.1} parent=1 // pred_region
      %s14 = ssub.s32 512, 512
      %15 = vsyncadd [#allocation3], %s14
      %s17 = sshll.u32 [#allocation2], 4
      %s18 = int_to_ptr.vmem [resolvable:$true] %s17
      %20 = dma.hbm_to_vmem [thread:$0]  %s0, 512, %s18, [#allocation3]
    $region5: #{res_fc_forward.1} parent=1 // pred_fallthru
      _
    // Predicated region
    $region6: #{res_fc_forward.1} parent=1 // pred_check
      _
    $region7: #{res_fc_forward.1} parent=1 // pred_check_branch
      %22 = sbr.rel (0) target = $region9
    $region8: #{res_fc_forward.1} parent=1 // pred_region
      %s24 = ssub.s32 4096, 4096
      %25 = vsyncadd [#allocation6], %s24
      %s26 = sshll.u32 [#allocation5], 4
      %s27 = int_to_ptr.vmem [resolvable:$true] %s26
      %32 = dma.hbm_to_vmem [thread:$0]  %s1, 4096, %s27, [#allocation6], 64, 64, 4
    $region9: #{res_fc_forward.1} parent=1 // pred_fallthru
      _
    // Predicated region
    $region10: #{res_fc_forward.1} parent=1 // pred_check
      _
    $region11: #{res_fc_forward.1} parent=1 // pred_check_branch
      %34 = sbr.rel (0) target = $region13
    $region12: #{res_fc_forward.1} parent=1 // pred_region
      _
    $region13: #{res_fc_forward.1} parent=1 // pred_fallthru
      _
    // Predicated region
    $region14: #{res_fc_forward.1} parent=1 // pred_check
      _
    $region15: #{res_fc_forward.1} parent=1 // pred_check_branch
      %36 = sbr.rel (0) target = $region17
    $region16: #{res_fc_forward.1} parent=1 // pred_region
      %37 = dma.done [#allocation3], 512
    $region17: #{res_fc_forward.1} parent=1 // pred_fallthru
      _
    // Predicated region
    $region18: #{res_fc_forward.1} parent=1 // pred_check
      _
    $region19: #{res_fc_forward.1} parent=1 // pred_check_branch
      %39 = sbr.rel (0) target = $region21
    $region20: #{res_fc_forward.1} parent=1 // pred_region
      %40 = dma.done [#allocation6], 4096
    $region21: #{res_fc_forward.1} parent=1 // pred_fallthru
      _
    %v42 = vld [vmem:[#allocation2] sm:$0xff]
    %v43 = vld [vmem:[#allocation2 + $0x8] sm:$0xff]
    %v44 = vld [vmem:[#allocation2 + $0x10] sm:$0xff]
    %v45 = vld [vmem:[#allocation2 + $0x18] sm:$0xff]
    %v46 = vpack.c.bf16 %v42, %v42
    %v47 = vpack.c.bf16 %v43, %v43
    %v48 = vpack.c.bf16 %v44, %v44
    %v49 = vpack.c.bf16 %v45, %v45
    %v50 = vld [vmem:[#allocation5] sm:$0xf]
    %v51 = vld [vmem:[#allocation5 + $0x4] sm:$0xf]
    %v52 = vld [vmem:[#allocation5 + $0x8] sm:$0xf]
    %v53 = vld [vmem:[#allocation5 + $0xc] sm:$0xf]
    %v54 = vld [vmem:[#allocation5 + $0x10] sm:$0xf]
    %v55 = vld [vmem:[#allocation5 + $0x14] sm:$0xf]
    %v56 = vld [vmem:[#allocation5 + $0x18] sm:$0xf]
    %v57 = vld [vmem:[#allocation5 + $0x1c] sm:$0xf]
    %v58 = vld [vmem:[#allocation5 + $0x20] sm:$0xf]
    %v59 = vld [vmem:[#allocation5 + $0x24] sm:$0xf]
    %v60 = vld [vmem:[#allocation5 + $0x28] sm:$0xf]
    %v61 = vld [vmem:[#allocation5 + $0x2c] sm:$0xf]
    %v62 = vld [vmem:[#allocation5 + $0x30] sm:$0xf]
    %v63 = vld [vmem:[#allocation5 + $0x34] sm:$0xf]
    %v64 = vld [vmem:[#allocation5 + $0x38] sm:$0xf]
    %v65 = vld [vmem:[#allocation5 + $0x3c] sm:$0xf]
    %v66 = vld [vmem:[#allocation5 + $0x40] sm:$0xf]
    %v67 = vld [vmem:[#allocation5 + $0x44] sm:$0xf]
    %v68 = vld [vmem:[#allocation5 + $0x48] sm:$0xf]
    %v69 = vld [vmem:[#allocation5 + $0x4c] sm:$0xf]
    %v70 = vld [vmem:[#allocation5 + $0x50] sm:$0xf]
    %v71 = vld [vmem:[#allocation5 + $0x54] sm:$0xf]
    %v72 = vld [vmem:[#allocation5 + $0x58] sm:$0xf]
    %v73 = vld [vmem:[#allocation5 + $0x5c] sm:$0xf]
    %v74 = vld [vmem:[#allocation5 + $0x60] sm:$0xf]
    %v75 = vld [vmem:[#allocation5 + $0x64] sm:$0xf]
    %v76 = vld [vmem:[#allocation5 + $0x68] sm:$0xf]
    %v77 = vld [vmem:[#allocation5 + $0x6c] sm:$0xf]
    %v78 = vld [vmem:[#allocation5 + $0x70] sm:$0xf]
    %v79 = vld [vmem:[#allocation5 + $0x74] sm:$0xf]
    %v80 = vld [vmem:[#allocation5 + $0x78] sm:$0xf]
    %v81 = vld [vmem:[#allocation5 + $0x7c] sm:$0xf]
    %v82 = vld [vmem:[#allocation5 + $0x80] sm:$0xf]
    %v83 = vld [vmem:[#allocation5 + $0x84] sm:$0xf]
    %v84 = vld [vmem:[#allocation5 + $0x88] sm:$0xf]
    %v85 = vld [vmem:[#allocation5 + $0x8c] sm:$0xf]
    %v86 = vld [vmem:[#allocation5 + $0x90] sm:$0xf]
    %v87 = vld [vmem:[#allocation5 + $0x94] sm:$0xf]
    %v88 = vld [vmem:[#allocation5 + $0x98] sm:$0xf]
    %v89 = vld [vmem:[#allocation5 + $0x9c] sm:$0xf]
    %v90 = vld [vmem:[#allocation5 + $0xa0] sm:$0xf]
    %v91 = vld [vmem:[#allocation5 + $0xa4] sm:$0xf]
    %v92 = vld [vmem:[#allocation5 + $0xa8] sm:$0xf]
    %v93 = vld [vmem:[#allocation5 + $0xac] sm:$0xf]
    %v94 = vld [vmem:[#allocation5 + $0xb0] sm:$0xf]
    %v95 = vld [vmem:[#allocation5 + $0xb4] sm:$0xf]
    %v96 = vld [vmem:[#allocation5 + $0xb8] sm:$0xf]
    %v97 = vld [vmem:[#allocation5 + $0xbc] sm:$0xf]
    %v98 = vld [vmem:[#allocation5 + $0xc0] sm:$0xf]
    %v99 = vld [vmem:[#allocation5 + $0xc4] sm:$0xf]
    %v100 = vld [vmem:[#allocation5 + $0xc8] sm:$0xf]
    %v101 = vld [vmem:[#allocation5 + $0xcc] sm:$0xf]
    %v102 = vld [vmem:[#allocation5 + $0xd0] sm:$0xf]
    %v103 = vld [vmem:[#allocation5 + $0xd4] sm:$0xf]
    %v104 = vld [vmem:[#allocation5 + $0xd8] sm:$0xf]
    %v105 = vld [vmem:[#allocation5 + $0xdc] sm:$0xf]
    %v106 = vld [vmem:[#allocation5 + $0xe0] sm:$0xf]
    %v107 = vld [vmem:[#allocation5 + $0xe4] sm:$0xf]
    %v108 = vld [vmem:[#allocation5 + $0xe8] sm:$0xf]
    %v109 = vld [vmem:[#allocation5 + $0xec] sm:$0xf]
    %v110 = vld [vmem:[#allocation5 + $0xf0] sm:$0xf]
    %v111 = vld [vmem:[#allocation5 + $0xf4] sm:$0xf]
    %v112 = vld [vmem:[#allocation5 + $0xf8] sm:$0xf]
    %v113 = vld [vmem:[#allocation5 + $0xfc] sm:$0xf]
    %v178 = vunpack.c.l.b16 %v50
    %v179 = vunpack.c.l.b16 %v51
    %v180 = vunpack.c.l.b16 %v52
    %v181 = vunpack.c.l.b16 %v53
    %v182 = vunpack.c.l.b16 %v54
    %v183 = vunpack.c.l.b16 %v55
    %v184 = vunpack.c.l.b16 %v56
    %v185 = vunpack.c.l.b16 %v57
    %v186 = vunpack.c.l.b16 %v58
    %v187 = vunpack.c.l.b16 %v59
    %v188 = vunpack.c.l.b16 %v60
    %v189 = vunpack.c.l.b16 %v61
    %v190 = vunpack.c.l.b16 %v62
    %v191 = vunpack.c.l.b16 %v63
    %v192 = vunpack.c.l.b16 %v64
    %v193 = vunpack.c.l.b16 %v65
    %v194 = vunpack.c.l.b16 %v66
    %v195 = vunpack.c.l.b16 %v67
    %v196 = vunpack.c.l.b16 %v68
    %v197 = vunpack.c.l.b16 %v69
    %v198 = vunpack.c.l.b16 %v70
    %v199 = vunpack.c.l.b16 %v71
    %v200 = vunpack.c.l.b16 %v72
    %v201 = vunpack.c.l.b16 %v73
    %v202 = vunpack.c.l.b16 %v74
    %v203 = vunpack.c.l.b16 %v75
    %v204 = vunpack.c.l.b16 %v76
    %v205 = vunpack.c.l.b16 %v77
    %v206 = vunpack.c.l.b16 %v78
    %v207 = vunpack.c.l.b16 %v79
    %v208 = vunpack.c.l.b16 %v80
    %v209 = vunpack.c.l.b16 %v81
    %v210 = vunpack.c.l.b16 %v82
    %v211 = vunpack.c.l.b16 %v83
    %v212 = vunpack.c.l.b16 %v84
    %v213 = vunpack.c.l.b16 %v85
    %v214 = vunpack.c.l.b16 %v86
    %v215 = vunpack.c.l.b16 %v87
    %v216 = vunpack.c.l.b16 %v88
    %v217 = vunpack.c.l.b16 %v89
    %v218 = vunpack.c.l.b16 %v90
    %v219 = vunpack.c.l.b16 %v91
    %v220 = vunpack.c.l.b16 %v92
    %v221 = vunpack.c.l.b16 %v93
    %v222 = vunpack.c.l.b16 %v94
    %v223 = vunpack.c.l.b16 %v95
    %v224 = vunpack.c.l.b16 %v96
    %v225 = vunpack.c.l.b16 %v97
    %v226 = vunpack.c.l.b16 %v98
    %v227 = vunpack.c.l.b16 %v99
    %v228 = vunpack.c.l.b16 %v100
    %v229 = vunpack.c.l.b16 %v101
    %v230 = vunpack.c.l.b16 %v102
    %v231 = vunpack.c.l.b16 %v103
    %v232 = vunpack.c.l.b16 %v104
    %v233 = vunpack.c.l.b16 %v105
    %v234 = vunpack.c.l.b16 %v106
    %v235 = vunpack.c.l.b16 %v107
    %v236 = vunpack.c.l.b16 %v108
    %v237 = vunpack.c.l.b16 %v109
    %v238 = vunpack.c.l.b16 %v110
    %v239 = vunpack.c.l.b16 %v111
    %v240 = vunpack.c.l.b16 %v112
    %v241 = vunpack.c.l.b16 %v113
    %v242 = vpack.c.b16 %v179, %v178
    %v243 = vpack.c.b16 %v181, %v180
    %v244 = vpack.c.b16 %v183, %v182
    %v245 = vpack.c.b16 %v185, %v184
    %v246 = vpack.c.b16 %v187, %v186
    %v247 = vpack.c.b16 %v189, %v188
    %v248 = vpack.c.b16 %v191, %v190
    %v249 = vpack.c.b16 %v193, %v192
    %v250 = vpack.c.b16 %v195, %v194
    %v251 = vpack.c.b16 %v197, %v196
    %v252 = vpack.c.b16 %v199, %v198
    %v253 = vpack.c.b16 %v201, %v200
    %v254 = vpack.c.b16 %v203, %v202
    %v255 = vpack.c.b16 %v205, %v204
    %v256 = vpack.c.b16 %v207, %v206
    %v257 = vpack.c.b16 %v209, %v208
    %v258 = vpack.c.b16 %v211, %v210
    %v259 = vpack.c.b16 %v213, %v212
    %v260 = vpack.c.b16 %v215, %v214
    %v261 = vpack.c.b16 %v217, %v216
    %v262 = vpack.c.b16 %v219, %v218
    %v263 = vpack.c.b16 %v221, %v220
    %v264 = vpack.c.b16 %v223, %v222
    %v265 = vpack.c.b16 %v225, %v224
    %v266 = vpack.c.b16 %v227, %v226
    %v267 = vpack.c.b16 %v229, %v228
    %v268 = vpack.c.b16 %v231, %v230
    %v269 = vpack.c.b16 %v233, %v232
    %v270 = vpack.c.b16 %v235, %v234
    %v271 = vpack.c.b16 %v237, %v236
    %v272 = vpack.c.b16 %v239, %v238
    %v273 = vpack.c.b16 %v241, %v240
    %306 = vmatprep.subr.bf16.mxu0 0
    %307 = vmatpush1.bf16.msra.mxu0 %v242
    %308 = vmatprep.subr.bf16.mxu0 0
    %309 = vmatpush1.bf16.msra.mxu0 %v243
    %310 = vmatprep.subr.bf16.mxu0 0
    %311 = vmatpush1.bf16.msra.mxu0 %v244
    %312 = vmatprep.subr.bf16.mxu0 0
    %313 = vmatpush1.bf16.msra.mxu0 %v245
    %314 = vmatprep.subr.bf16.mxu0 0
    %315 = vmatpush1.bf16.msra.mxu0 %v246
    %316 = vmatprep.subr.bf16.mxu0 0
    %317 = vmatpush1.bf16.msra.mxu0 %v247
    %318 = vmatprep.subr.bf16.mxu0 0
    %319 = vmatpush1.bf16.msra.mxu0 %v248
    %320 = vmatprep.subr.bf16.mxu0 0
    %321 = vmatpush1.bf16.msra.mxu0 %v249
    %322 = vmatprep.subr.bf16.mxu0 0
    %323 = vmatpush1.bf16.msra.mxu0 %v250
    %324 = vmatprep.subr.bf16.mxu0 0
    %325 = vmatpush1.bf16.msra.mxu0 %v251
    %326 = vmatprep.subr.bf16.mxu0 0
    %327 = vmatpush1.bf16.msra.mxu0 %v252
    %328 = vmatprep.subr.bf16.mxu0 0
    %329 = vmatpush1.bf16.msra.mxu0 %v253
    %330 = vmatprep.subr.bf16.mxu0 0
    %331 = vmatpush1.bf16.msra.mxu0 %v254
    %332 = vmatprep.subr.bf16.mxu0 0
    %333 = vmatpush1.bf16.msra.mxu0 %v255
    %334 = vmatprep.subr.bf16.mxu0 0
    %335 = vmatpush1.bf16.msra.mxu0 %v256
    %336 = vmatprep.subr.bf16.mxu0 0
    %337 = vmatpush1.bf16.msra.mxu0 %v257
    %338 = vmatprep.mubr.bf16.mxu0 %v47
    %339 = vmatmul.mubr.bf16.gmra.mrb[0].mxu0 %v46
    %v340 = vpop.f32.mrb[0].mxu0
    %v341 = vadd.f32 0.0, %v340
    %v342 = vpop.f32.mrb[0].mxu0
    %v343 = vpop.f32.mrb[0].mxu0
    %v344 = vpop.f32.mrb[0].mxu0
    %345 = vdwg.mxu0
    %346 = vmatprep.subr.bf16.mxu0 0
    %347 = vmatpush1.bf16.msra.mxu0 %v258
    %348 = vmatprep.subr.bf16.mxu0 0
    %349 = vmatpush1.bf16.msra.mxu0 %v259
    %350 = vmatprep.subr.bf16.mxu0 0
    %351 = vmatpush1.bf16.msra.mxu0 %v260
    %352 = vmatprep.subr.bf16.mxu0 0
    %353 = vmatpush1.bf16.msra.mxu0 %v261
    %354 = vmatprep.subr.bf16.mxu0 0
    %355 = vmatpush1.bf16.msra.mxu0 %v262
    %356 = vmatprep.subr.bf16.mxu0 0
    %357 = vmatpush1.bf16.msra.mxu0 %v263
    %358 = vmatprep.subr.bf16.mxu0 0
    %359 = vmatpush1.bf16.msra.mxu0 %v264
    %360 = vmatprep.subr.bf16.mxu0 0
    %361 = vmatpush1.bf16.msra.mxu0 %v265
    %362 = vmatprep.subr.bf16.mxu0 0
    %363 = vmatpush1.bf16.msra.mxu0 %v266
    %364 = vmatprep.subr.bf16.mxu0 0
    %365 = vmatpush1.bf16.msra.mxu0 %v267
    %366 = vmatprep.subr.bf16.mxu0 0
    %367 = vmatpush1.bf16.msra.mxu0 %v268
    %368 = vmatprep.subr.bf16.mxu0 0
    %369 = vmatpush1.bf16.msra.mxu0 %v269
    %370 = vmatprep.subr.bf16.mxu0 0
    %371 = vmatpush1.bf16.msra.mxu0 %v270
    %372 = vmatprep.subr.bf16.mxu0 0
    %373 = vmatpush1.bf16.msra.mxu0 %v271
    %374 = vmatprep.subr.bf16.mxu0 0
    %375 = vmatpush1.bf16.msra.mxu0 %v272
    %376 = vmatprep.subr.bf16.mxu0 0
    %377 = vmatpush1.bf16.msra.mxu0 %v273
    %378 = vmatprep.mubr.bf16.mxu0 %v49
    %379 = vmatmul.mubr.bf16.gmra.mrb[0].mxu0 %v48
    %v380 = vpop.f32.mrb[0].mxu0
    %v381 = vadd.f32 %v341, %v380
    %v382 = vpop.f32.mrb[0].mxu0
    %v383 = vpop.f32.mrb[0].mxu0
    %v384 = vpop.f32.mrb[0].mxu0
    %385 = vdwg.mxu0
    %v386 = vld [vmem:[%s2] sm:$0x1]
    %v388 = vlaneseq
    %v389 = vshrl.u32 %v388, 7
    %v390 = vsub.s32 0, %v389
    %v391 = vrot.slane %v386, %v390
    %v393 = vadd.f32 %v381, %v391
    %v394 = vmax.f32 %v393, 0.0
    %vm395 = vcmask 121856
    %396 = vst.msk [vmem:[#allocation7] sm:$0xff] %vm395, %v394
    // Predicated region
    $region22: #{res_fc_forward.1} parent=1 // pred_check
      _
    $region23: #{res_fc_forward.1} parent=1 // pred_check_branch
      %398 = sbr.rel (0) target = $region25
    $region24: #{res_fc_forward.1} parent=1 // pred_region
      %s400 = ssub.s32 128, 128
      %401 = vsyncadd [#allocation4], %s400
      %s403 = sshll.u32 [#allocation7], 4
      %s404 = int_to_ptr.vmem [resolvable:$true] %s403
      %406 = dma.vmem_to_hbm [thread:$0]  %s404, 128, %s3, [#allocation4]
    $region25: #{res_fc_forward.1} parent=1 // pred_fallthru
      _
    // Predicated region
    $region26: #{res_fc_forward.1} parent=1 // pred_check
      _
    $region27: #{res_fc_forward.1} parent=1 // pred_check_branch
      %408 = sbr.rel (0) target = $region29
    $region28: #{res_fc_forward.1} parent=1 // pred_region
      %409 = dma.done [#allocation4], 128
    $region29: #{res_fc_forward.1} parent=1 // pred_fallthru
      _
    %410 = vsyncpa [#allocation3], 1
    %411 = vsyncpa [#allocation6], 1
    %412 = vsyncpa [#allocation4], 1

</llo_original>
